<compile_context>
chip_gen: v5e
topology: v5e:2x2
jax: 0.10.0
libtpu: 0.0.40
codegen_flags: <defaults>
</compile_context>

<pallas_src>
import functools

import jax
import jax.numpy as jnp
from jax.experimental import pallas as pl
from jax.experimental.pallas import tpu as pltpu


def _clamp_vmem(nbytes):
    # Floor at the v6e/v7x default scoped limit, cap under v7x's 64 MiB physical VMEM.
    return int(min(max(nbytes, 32 * 1024 * 1024), 64 * 1024 * 1024))


# ---------------------------------------------------------------------------
# K/V projection kernel: runs once per (batch, key-row tile). Hoisted out of the
# query-tile loop so the two (Lk,H)x(H,H) projections are never recomputed.
# ---------------------------------------------------------------------------
def _kv_proj_kernel(v_ref, wk_ref, bk_ref, wv_ref, bv_ref, kp_ref, vp_ref):
    f32 = jnp.float32
    v_in = v_ref[...]                                                 # (tk, H) bf16
    kp = jnp.dot(v_in, wk_ref[...], preferred_element_type=f32) + bk_ref[...]
    vp = jnp.dot(v_in, wv_ref[...], preferred_element_type=f32) + bv_ref[...]
    kp_ref[...] = kp.astype(kp_ref.dtype)
    vp_ref[...] = vp.astype(vp_ref.dtype)


# ---------------------------------------------------------------------------
# Attention kernel: one (batch, query-tile) grid step.
#   q_ref:        (tq, H)  bf16 query rows (batch dim squeezed)
#   kp/vp_ref:    (Lk, H)  bf16 pre-projected keys / values for this batch element
#   wq_ref/bq_ref: pre-transposed bf16 w_q (scale folded) / pre-scaled f32 bias
#   wo_ref/bo_ref: pre-transposed bf16 w_o / f32 bias
# ---------------------------------------------------------------------------
def _attention_kernel(q_ref, kp_ref, vp_ref,
                      wq_ref, bq_ref, wo_ref, bo_ref,
                      o_ref, *, n_head, d_head):
    f32 = jnp.float32
    bf16 = jnp.bfloat16
    tq = q_ref.shape[0]
    H = wo_ref.shape[1]

    # Query projection for this tile only (attention scale already folded in).
    q_p = (jnp.dot(q_ref[...], wq_ref[...], preferred_element_type=f32)
           + bq_ref[...]).astype(bf16)                                # (tq, H)
    k_p = kp_ref[...]                                                 # (Lk, H) bf16
    v_p = vp_ref[...]                                                 # (Lk, H) bf16

    acc = jnp.zeros((tq, H), f32)
    # TODO(synk): for long Lk add an 'arbitrary' Lk grid axis with online softmax
    # (m/l/acc scratch) instead of holding the full (Lk,H) block + (tq,Lk) scores.
    # TODO(synk): switch this static head unroll to lax.fori_loop(unroll=True) with
    # pl.ds column slices once d_head is a 128-multiple (bounded live ranges).
    for h in range(n_head):
        lo = h * d_head
        qh = q_p[:, lo:lo + d_head]                                   # (tq, dh)
        kh = k_p[:, lo:lo + d_head]                                   # (Lk, dh)
        vh = v_p[:, lo:lo + d_head]                                   # (Lk, dh)

        # q @ k.T as a last-dim contraction (no explicit transpose -> no XLU).
        s = jnp.einsum('ld,md->lm', qh, kh,
                       preferred_element_type=f32)                    # (tq, Lk) f32
        # TODO(synk): additive mask path (y - 10000*(mask==0)) would go here, before
        # the max-subtract, if mask support is added.
        s = s - jnp.max(s, axis=-1, keepdims=True)
        e = jnp.exp(s)                                                # f32 (v5e-safe)
        p = e * pl.reciprocal(jnp.sum(e, axis=-1, keepdims=True), approx=True)
        yh = jnp.dot(p.astype(bf16), vh, preferred_element_type=f32)  # (tq, dh)
        # Accumulate the output projection per head: only the lane-dense (tq, H)
        # o_ref write is ever stored (no narrow masked column stores).
        acc = acc + jnp.dot(yh.astype(bf16), wo_ref[lo:lo + d_head, :],
                            preferred_element_type=f32)

    o_ref[...] = (acc + bo_ref[...]).astype(o_ref.dtype)


def attention_layer(q, k, v, params, *, n_head, mask=None):
    """Pallas implementation of AttentionLayer.forward (mask=None only)."""
    del k  # faithfully mirrors the PyTorch module: k projection uses `v`.
    assert mask is None, "mask path not implemented"
    B, L, H = q.shape
    Lk = v.shape[1]
    assert H % n_head == 0
    d_head = H // n_head
    scale = float(d_head) ** -0.5
    bf16, f32 = jnp.bfloat16, jnp.float32

    wq, bq, wk, bk, wv, bv, wo, bo = params

    # One-time layout / dtype plumbing (outside the kernels):
    #  - pre-transpose so kernels do x @ W_t directly (no per-step XLU transpose)
    #  - fold the attention scale into the query projection weight + bias
    #  - bf16 weights + activations (MXU-native; halves HBM/VMEM traffic)
    wq_t = (wq.T * scale).astype(bf16)
    wk_t = wk.T.astype(bf16)
    wv_t = wv.T.astype(bf16)
    wo_t = wo.T.astype(bf16)
    bq_s = (bq * scale).reshape(1, H).astype(f32)
    bk_r = bk.reshape(1, H).astype(f32)
    bv_r = bv.reshape(1, H).astype(f32)
    bo_r = bo.reshape(1, H).astype(f32)

    q_bf = q.astype(bf16)
    v_bf = v.astype(bf16)

    # ---------------- K/V projection call (once per batch element) ----------------
    tk = 256 if Lk % 256 == 0 else (128 if Lk % 128 == 0 else Lk)
    n_lk = Lk // tk

    proj_vmem = int((2 * tk * H * 2            # v tile (bf16, double-buffered)
                     + 2 * 2 * H * H * 2       # wk_t + wv_t (double-buffered)
                     + 2 * 2 * tk * H * 2      # kp + vp output tiles
                     + 2 * tk * H * 4          # f32 accumulation temporaries
                     ) * 1.5)
    proj_cost = pl.CostEstimate(
        flops=4 * B * Lk * H * H,
        transcendentals=0,
        bytes_accessed=3 * B * Lk * H * 2 + 2 * H * H * 2)

    kp, vp = pl.pallas_call(
        _kv_proj_kernel,
        out_shape=(jax.ShapeDtypeStruct((B, Lk, H), bf16),
                   jax.ShapeDtypeStruct((B, Lk, H), bf16)),
        grid_spec=pltpu.PrefetchScalarGridSpec(
            num_scalar_prefetch=0,
            grid=(B, n_lk),
            in_specs=[
                pl.BlockSpec((pl.Squeezed(), tk, H), lambda b, l: (b, l, 0)),  # v
                pl.BlockSpec((H, H), lambda b, l: (0, 0)),                     # w_k
                pl.BlockSpec((1, H), lambda b, l: (0, 0)),                     # b_k
                pl.BlockSpec((H, H), lambda b, l: (0, 0)),                     # w_v
                pl.BlockSpec((1, H), lambda b, l: (0, 0)),                     # b_v
            ],
            out_specs=[
                pl.BlockSpec((pl.Squeezed(), tk, H), lambda b, l: (b, l, 0)),  # k_p
                pl.BlockSpec((pl.Squeezed(), tk, H), lambda b, l: (b, l, 0)),  # v_p
            ],
        ),
        compiler_params=pltpu.CompilerParams(
            dimension_semantics=("parallel", "parallel"),
            vmem_limit_bytes=_clamp_vmem(proj_vmem)),
        cost_estimate=proj_cost,
    )(v_bf, wk_t, bk_r, wv_t, bv_r)

    # ---------------- attention call, tiled over (batch, query tiles) -------------
    # Pad the query length so tiles stay 8-aligned and bounded (no giant tq=L tile).
    if L >= 256:
        tq = 256
    else:
        tq = -(-L // 8) * 8
    L_pad = -(-L // tq) * tq
    if L_pad != L:
        q_bf = jnp.pad(q_bf, ((0, 0), (0, L_pad - L), (0, 0)))
    n_l = L_pad // tq

    # TODO(synk): single-buffer the constant-index (H,H) weights and the (Lk,H)
    # kp/vp blocks (pl.Buffered(1) / ANY + one-time DMA) to halve weight VMEM on v7x.
    attn_vmem = int((2 * tq * H * 2            # q tile (bf16, double-buffered)
                     + 2 * 2 * Lk * H * 2      # kp + vp blocks (double-buffered)
                     + 2 * 2 * H * H * 2       # wq_t + wo_t (double-buffered)
                     + 2 * tq * H * 4          # f32 output tile (double-buffered)
                     + tq * H * (2 + 4)        # q_p (bf16) + acc (f32) live values
                     + 4 * tq * Lk * 4         # per-head score/exp/prob temporaries
                     ) * 1.3)
    attn_cost = pl.CostEstimate(
        flops=4 * B * L_pad * H * H + 4 * B * L_pad * Lk * H,
        transcendentals=B * n_head * L_pad * Lk,
        bytes_accessed=(B * L_pad * H * 2 + 2 * B * Lk * H * 2
                        + 2 * H * H * 2 + B * L_pad * H * 4))

    kern = functools.partial(_attention_kernel, n_head=n_head, d_head=d_head)

    out = pl.pallas_call(
        kern,
        out_shape=jax.ShapeDtypeStruct((B, L_pad, H), q.dtype),
        grid_spec=pltpu.PrefetchScalarGridSpec(
            num_scalar_prefetch=0,
            grid=(B, n_l),
            in_specs=[
                pl.BlockSpec((pl.Squeezed(), tq, H), lambda b, l: (b, l, 0)),  # q
                pl.BlockSpec((pl.Squeezed(), Lk, H), lambda b, l: (b, 0, 0)),  # k_p
                pl.BlockSpec((pl.Squeezed(), Lk, H), lambda b, l: (b, 0, 0)),  # v_p
                pl.BlockSpec((H, H), lambda b, l: (0, 0)),                     # w_q
                pl.BlockSpec((1, H), lambda b, l: (0, 0)),                     # b_q
                pl.BlockSpec((H, H), lambda b, l: (0, 0)),                     # w_o
                pl.BlockSpec((1, H), lambda b, l: (0, 0)),                     # b_o
            ],
            out_specs=pl.BlockSpec((pl.Squeezed(), tq, H), lambda b, l: (b, l, 0)),
        ),
        compiler_params=pltpu.CompilerParams(
            dimension_semantics=("parallel", "parallel"),
            vmem_limit_bytes=_clamp_vmem(attn_vmem)),
        cost_estimate=attn_cost,
    )(q_bf, kp, vp, wq_t, bq_s, wo_t, bo_r)

    if L_pad != L:
        out = out[:, :L, :]
    return out


def init_params(key, hidden_size):
    """Deterministic init mimicking nn.Linear defaults: U(-1/sqrt(in), 1/sqrt(in))."""
    bound = 1.0 / (hidden_size ** 0.5)
    keys = jax.random.split(key, 8)

    def u(k, shape):
        return jax.random.uniform(k, shape, jnp.float32, -bound, bound)

    wq, bq = u(keys[0], (hidden_size, hidden_size)), u(keys[1], (hidden_size,))
    wk, bk = u(keys[2], (hidden_size, hidden_size)), u(keys[3], (hidden_size,))
    wv, bv = u(keys[4], (hidden_size, hidden_size)), u(keys[5], (hidden_size,))
    wo, bo = u(keys[6], (hidden_size, hidden_size)), u(keys[7], (hidden_size,))
    return (wq, bq, wk, bk, wv, bv, wo, bo)


def reference_jax(q, k, v, params, n_head):
    """Pure-JAX f32 reference replicating the PyTorch forward exactly."""
    del k
    wq, bq, wk, bk, wv, bv, wo, bo = params
    B, L, H = q.shape
    dh = H // n_head
    q_p = q @ wq.T + bq
    k_p = v @ wk.T + bk
    v_p = v @ wv.T + bv
    qh = q_p.reshape(B, L, n_head, dh).transpose(0, 2, 1, 3)
    kh = k_p.reshape(B, -1, n_head, dh).transpose(0, 2, 1, 3)
    vh = v_p.reshape(B, -1, n_head, dh).transpose(0, 2, 1, 3)
    s = jnp.einsum('bhld,bhmd->bhlm', qh, kh) * dh ** (-0.5)
    p = jax.nn.softmax(s, axis=-1)
    y = jnp.einsum('bhlm,bhmd->bhld', p, vh)
    y = y.transpose(0, 2, 1, 3).reshape(B, L, H)
    return y @ wo.T + bo


if __name__ == "__main__":
    B, L, H, NH = 2, 8, 32, 4

    key = jax.random.PRNGKey(0)
    kq, kk, kv, kparam = jax.random.split(key, 4)
    q = jax.random.normal(kq, (B, L, H), jnp.float32)
    k = jax.random.normal(kk, (B, L, H), jnp.float32)
    v = jax.random.normal(kv, (B, L, H), jnp.float32)
    params = init_params(kparam, H)

    out = attention_layer(q, k, v, params, n_head=NH)
    out = jax.block_until_ready(out)

    ref = reference_jax(q, k, v, params, NH)
    assert out.shape == (B, L, H)
    # bf16 matmul operands + approx reciprocal -> per-row softmax sums are not
    # exactly 1; tolerance intentionally looser than a pure-f32 comparison.
    assert jnp.allclose(out, ref, atol=5e-2, rtol=5e-2), "mismatch vs reference"

    print("KERNEL_OK")
</pallas_src>

<mosaic_0001>
module attributes {stable_mosaic.version = 11 : i64} {
  func.func @_kv_proj_kernel(%arg0: i32, %arg1: i32, %arg2: memref<1x8x32xbf16, #tpu.memory_space<vmem>>, %arg3: memref<32x32xbf16, #tpu.memory_space<vmem>>, %arg4: memref<1x32xf32, #tpu.memory_space<vmem>>, %arg5: memref<32x32xbf16, #tpu.memory_space<vmem>>, %arg6: memref<1x32xf32, #tpu.memory_space<vmem>>, %arg7: memref<1x8x32xbf16, #tpu.memory_space<vmem>>, %arg8: memref<1x8x32xbf16, #tpu.memory_space<vmem>>) attributes {dimension_semantics = [#tpu.dimension_semantics<parallel>, #tpu.dimension_semantics<parallel>], iteration_bounds = array<i64: 2, 1>, scalar_prefetch = 0 : i64, scratch_operands = 0 : i64, tpu.core_type = #tpu.core_type<tc>, window_params = [{transform_indices = @transform_0, window_bounds = array<i64: 1, 8, 32>}, {pipeline_mode = #tpu.pipeline_mode<synchronous>, transform_indices = @transform_1, window_bounds = array<i64: 32, 32>}, {pipeline_mode = #tpu.pipeline_mode<synchronous>, transform_indices = @transform_2, window_bounds = array<i64: 1, 32>}, {pipeline_mode = #tpu.pipeline_mode<synchronous>, transform_indices = @transform_3, window_bounds = array<i64: 32, 32>}, {pipeline_mode = #tpu.pipeline_mode<synchronous>, transform_indices = @transform_4, window_bounds = array<i64: 1, 32>}, {transform_indices = @transform_5, window_bounds = array<i64: 1, 8, 32>}, {transform_indices = @transform_6, window_bounds = array<i64: 1, 8, 32>}]} {
    %c0 = arith.constant 0 : index
    %c0_0 = arith.constant 0 : index
    %c0_1 = arith.constant 0 : index
    %0 = vector.load %arg2[%c0, %c0_0, %c0_1] : memref<1x8x32xbf16, #tpu.memory_space<vmem>>, vector<1x8x32xbf16>
    %1 = vector.shape_cast %0 : vector<1x8x32xbf16> to vector<8x32xbf16>
    %c0_2 = arith.constant 0 : index
    %c0_3 = arith.constant 0 : index
    %2 = vector.load %arg3[%c0_2, %c0_3] : memref<32x32xbf16, #tpu.memory_space<vmem>>, vector<32x32xbf16>
    %cst = arith.constant dense<0.000000e+00> : vector<8x32xf32>
    %3 = tpu.matmul %1, %2, %cst {dimension_numbers = #tpu.dot_dimension_numbers<[1], [0], [0], [1], [0, 0, 1, 1], [], []>} : vector<8x32xbf16>, vector<32x32xbf16>, vector<8x32xf32> -> vector<8x32xf32>
    %c0_4 = arith.constant 0 : index
    %c0_5 = arith.constant 0 : index
    %4 = vector.load %arg4[%c0_4, %c0_5] : memref<1x32xf32, #tpu.memory_space<vmem>>, vector<1x32xf32>
    %5 = vector.broadcast %4 : vector<1x32xf32> to vector<8x32xf32>
    %6 = arith.addf %3, %5 : vector<8x32xf32>
    %c0_6 = arith.constant 0 : index
    %c0_7 = arith.constant 0 : index
    %7 = vector.load %arg5[%c0_6, %c0_7] : memref<32x32xbf16, #tpu.memory_space<vmem>>, vector<32x32xbf16>
    %cst_8 = arith.constant dense<0.000000e+00> : vector<8x32xf32>
    %8 = tpu.matmul %1, %7, %cst_8 {dimension_numbers = #tpu.dot_dimension_numbers<[1], [0], [0], [1], [0, 0, 1, 1], [], []>} : vector<8x32xbf16>, vector<32x32xbf16>, vector<8x32xf32> -> vector<8x32xf32>
    %c0_9 = arith.constant 0 : index
    %c0_10 = arith.constant 0 : index
    %9 = vector.load %arg6[%c0_9, %c0_10] : memref<1x32xf32, #tpu.memory_space<vmem>>, vector<1x32xf32>
    %10 = vector.broadcast %9 : vector<1x32xf32> to vector<8x32xf32>
    %11 = arith.addf %8, %10 : vector<8x32xf32>
    %12 = arith.truncf %6 : vector<8x32xf32> to vector<8x32xbf16>
    %c0_11 = arith.constant 0 : index
    %c0_12 = arith.constant 0 : index
    %c0_13 = arith.constant 0 : index
    %13 = vector.load %arg7[%c0_11, %c0_12, %c0_13] : memref<1x8x32xbf16, #tpu.memory_space<vmem>>, vector<1x8x32xbf16>
    %14 = vector.shape_cast %13 : vector<1x8x32xbf16> to vector<8x32xbf16>
    %15 = vector.shape_cast %12 : vector<8x32xbf16> to vector<1x8x32xbf16>
    tpu.vector_store %arg7[%c0_11, %c0_12, %c0_13], %15 {strides = array<i32>} : memref<1x8x32xbf16, #tpu.memory_space<vmem>>, vector<1x8x32xbf16>,
    %16 = arith.truncf %11 : vector<8x32xf32> to vector<8x32xbf16>
    %c0_14 = arith.constant 0 : index
    %c0_15 = arith.constant 0 : index
    %c0_16 = arith.constant 0 : index
    %17 = vector.load %arg8[%c0_14, %c0_15, %c0_16] : memref<1x8x32xbf16, #tpu.memory_space<vmem>>, vector<1x8x32xbf16>
    %18 = vector.shape_cast %17 : vector<1x8x32xbf16> to vector<8x32xbf16>
    %19 = vector.shape_cast %16 : vector<8x32xbf16> to vector<1x8x32xbf16>
    tpu.vector_store %arg8[%c0_14, %c0_15, %c0_16], %19 {strides = array<i32>} : memref<1x8x32xbf16, #tpu.memory_space<vmem>>, vector<1x8x32xbf16>,
    return
  }
  func.func @transform_0(%arg0: i32, %arg1: i32) -> (i32, i32, i32) {
    %c0_i32 = arith.constant 0 : i32
    %c0_i32_0 = arith.constant 0 : i32
    return %arg0, %arg1, %c0_i32 : i32, i32, i32
  }
  func.func @transform_1(%arg0: i32, %arg1: i32) -> (i32, i32) {
    %c0_i32 = arith.constant 0 : i32
    %c0_i32_0 = arith.constant 0 : i32
    %c0_i32_1 = arith.constant 0 : i32
    return %c0_i32, %c0_i32_0 : i32, i32
  }
  func.func @transform_2(%arg0: i32, %arg1: i32) -> (i32, i32) {
    %c0_i32 = arith.constant 0 : i32
    %c0_i32_0 = arith.constant 0 : i32
    %c0_i32_1 = arith.constant 0 : i32
    return %c0_i32, %c0_i32_0 : i32, i32
  }
  func.func @transform_3(%arg0: i32, %arg1: i32) -> (i32, i32) {
    %c0_i32 = arith.constant 0 : i32
    %c0_i32_0 = arith.constant 0 : i32
    %c0_i32_1 = arith.constant 0 : i32
    return %c0_i32, %c0_i32_0 : i32, i32
  }
  func.func @transform_4(%arg0: i32, %arg1: i32) -> (i32, i32) {
    %c0_i32 = arith.constant 0 : i32
    %c0_i32_0 = arith.constant 0 : i32
    %c0_i32_1 = arith.constant 0 : i32
    return %c0_i32, %c0_i32_0 : i32, i32
  }
  func.func @transform_5(%arg0: i32, %arg1: i32) -> (i32, i32, i32) {
    %c0_i32 = arith.constant 0 : i32
    %c0_i32_0 = arith.constant 0 : i32
    return %arg0, %arg1, %c0_i32 : i32, i32, i32
  }
  func.func @transform_6(%arg0: i32, %arg1: i32) -> (i32, i32, i32) {
    %c0_i32 = arith.constant 0 : i32
    %c0_i32_0 = arith.constant 0 : i32
    return %arg0, %arg1, %c0_i32 : i32, i32, i32
  }
}

</mosaic_0001>

<llo_original>
// kernel: tpu_custom_call.1
$region0: #{tpu_custom_call.1}
  #allocation0 [shape = 'u32[]', space=smem, size = 0x4, offset = 0x4, fixed_abs, tag = 'smem constant byte address 0x4 - core index']
  #allocation1 [shape = 'u32[72,128]{1,0:T(1,128)}', space=vmem, size = 0x9000, scoped, tag = 'internal scratch']
  %s0 = inlined_call_operand.hbm [shape: bf16[2,8,32], index: 0, kind: input, shape index: {}]
  %s1 = inlined_call_operand.hbm [shape: bf16[32,32], index: 1, kind: input, shape index: {}]
  %s2 = inlined_call_operand.vmem [shape: f32[1,32], index: 2, kind: input, shape index: {}]
  %s3 = inlined_call_operand.hbm [shape: bf16[32,32], index: 3, kind: input, shape index: {}]
  %s4 = inlined_call_operand.vmem [shape: f32[1,32], index: 4, kind: input, shape index: {}]
  %s5 = inlined_call_operand.hbm [shape: bf16[2,8,32], index: 5, kind: output, shape index: {0}]
  %s6 = inlined_call_operand.hbm [shape: bf16[2,8,32], index: 6, kind: output, shape index: {1}]
  %7 = xla_tuple %s5, %s6
  %s8 = sld [smem:[#allocation0]]
  $region73: #{tpu_custom_call.1} parent=0
    _
  %s10 = ssub.s32 1, %s8
  %s11 = scalar_select 0, %s10, %s8
  $region1: #{tpu_custom_call.1} parent=0
    #allocation2 [shape = 'u8[4096]{0}', space=vmem, size = 0x1000, scoped, tag = 'input window, operand 0']
    #allocation3 [shape = 's32[2]{0}', space=sflag, size = 0x8, scoped, tag = 'scoped memory for tpu_custom_call.1']
    #allocation4 [shape = 's32[2]{0}', space=sflag, size = 0x8, scoped, tag = 'scoped memory for tpu_custom_call.1']
    #allocation5 [shape = 'u8[8192]{0}', space=vmem, size = 0x2000, scoped, tag = 'input window, operand 1, single buffered']
    #allocation6 [shape = 's32[1]{0}', space=sflag, size = 0x4, scoped, tag = 'scoped memory for tpu_custom_call.1']
    #allocation7 [shape = 'u8[8192]{0}', space=vmem, size = 0x2000, scoped, tag = 'input window, operand 3, single buffered']
    #allocation8 [shape = 'u8[4096]{0}', space=vmem, size = 0x1000, scoped, tag = 'output window, operand 0']
    #allocation9 [shape = 'u8[4096]{0}', space=vmem, size = 0x1000, scoped, tag = 'output window, operand 1']
    #allocation10 [shape = 's32[2]{0}', space=sflag, size = 0x8, scoped, tag = 'scoped memory for tpu_custom_call.1']
    %12 = vsyncpa [#allocation3], 0
    %s13 = scalar_lea.sflag [#allocation3], 1
    %14 = vsyncpa %s13, 0
    %15 = vsyncpa [#allocation6], 0
    %16 = vsyncpa [#allocation4], 0
    %s17 = scalar_lea.sflag [#allocation4], 1
    %18 = vsyncpa %s17, 0
    %19 = vsyncpa [#allocation10], 0
    %s20 = scalar_lea.sflag [#allocation10], 1
    %21 = vsyncpa %s20, 0
    loop: start=0, step=1, limit=4
    $region2: #{tpu_custom_call.1} parent=1 // loop_pre_header
      _
    $region3: #{tpu_custom_call.1} parent=1 // loop_header
      %s23 = sphi 0, %s27
      %p24 = scmp.ge.s32.totalorder %s23, 4
      %s30 = sphi 0, %s42
      %s31 = sphi 0, %s38
      %s32 = sphi 0, %s30
      %s33 = sphi 0, %s31
      %s34 = sphi 0, %s32
      %s35 = sphi 0, %s33
      %s47 = sphi 0, %s49
      %s50 = sphi 0, %s47
      %s51 = sphi 0, %s50
      %s67 = sphi 0, %s51
      %s71 = sphi 0, %s71
      %s73 = sphi 0, %s71
      %s74 = sphi 0, %s73
      %s88 = sphi 0, %s74
      %s92 = sphi 0, %s92
      %s94 = sphi 0, %s92
      %s95 = sphi 0, %s94
      %s109 = sphi 0, %s95
      %s113 = sphi 0, %s113
      %s115 = sphi 0, %s113
      %s116 = sphi 0, %s115
      %s130 = sphi 0, %s116
      %s134 = sphi 0, %s134
      %s136 = sphi 0, %s134
      %s137 = sphi 0, %s136
      %s151 = sphi 0, %s137
      %s159 = sphi 0, %s161
      %s162 = sphi 0, %s159
      %s163 = sphi 0, %s162
      %s179 = sphi 0, %s163
      %s187 = sphi 0, %s189
      %s190 = sphi 0, %s187
      %s191 = sphi 0, %s190
      %s207 = sphi 0, %s191
    $region4: #{tpu_custom_call.1} parent=1 // loop_header_branch
      %26 = sbr.rel (%p24) target = $region8
    $region5: #{tpu_custom_call.1} parent=1 // loop_body
      %s28 = ssub.s32 %s23, 1
      %s29 = ssub.s32 %s23, 2
      %s36 = sadd.s32 1, %s31
      %p37 = scmp.ge.s32.totalorder %s36, 1
      %s38 = scalar_select %p37, 0, %s36
      %s39 = sadd.s32 1, %s30
      %s40 = scalar_select %p37, %s39, %s30
      %p41 = scmp.ge.s32.totalorder %s40, 2
      %s42 = scalar_select %p41, 0, %s40
      %s43 = ssub.s32 %s30, %s42
      %s44 = ssub.s32 %s31, %s38
      %s45 = sor.u32 %s43, %s44
      %p46 = scmp.eq.s32.totalorder %s45, 0
      %s48 = sadd.s32 %s47, 1
      %s49 = scalar_select %p46, %s47, %s48
      %p52 = pneg %p46
      %p53 = scmp.eq.s32.totalorder %s23, 1
      %p54 = por %p52, %p53
      %p55 = scmp.ne.s32.totalorder %s47, %s50
      %p56 = scmp.eq.s32.totalorder %s23, 0
      %p57 = por %p55, %p56
      %p58 = scmp.ne.s32.totalorder %s47, %s50
      %p59 = scmp.eq.s32.totalorder %s28, 1
      %p60 = por %p58, %p59
      %p61 = scmp.ne.s32.totalorder %s50, %s51
      %p62 = scmp.eq.s32.totalorder %s28, 0
      %p63 = por %p61, %p62
      %p64 = scmp.ne.s32.totalorder %s50, %s51
      %p65 = scmp.eq.s32.totalorder %s29, 1
      %p66 = por %p64, %p65
      %p68 = scmp.ne.s32.totalorder %s51, %s67
      %p69 = scmp.eq.s32.totalorder %s29, 0
      %p70 = por %p68, %p69
      %s72 = sadd.s32 %s71, 1
      %p75 = scmp.eq.s32.totalorder %s23, 1
      %p76 = scmp.ne.s32.totalorder %s71, %s73
      %p77 = scmp.eq.s32.totalorder %s23, 0
      %p78 = por %p76, %p77
      %p79 = scmp.ne.s32.totalorder %s71, %s73
      %p80 = scmp.eq.s32.totalorder %s28, 1
      %p81 = por %p79, %p80
      %p82 = scmp.ne.s32.totalorder %s73, %s74
      %p83 = scmp.eq.s32.totalorder %s28, 0
      %p84 = por %p82, %p83
      %p85 = scmp.ne.s32.totalorder %s73, %s74
      %p86 = scmp.eq.s32.totalorder %s29, 1
      %p87 = por %p85, %p86
      %p89 = scmp.ne.s32.totalorder %s74, %s88
      %p90 = scmp.eq.s32.totalorder %s29, 0
      %p91 = por %p89, %p90
      %s93 = sadd.s32 %s92, 1
      %p96 = scmp.eq.s32.totalorder %s23, 1
      %p97 = scmp.ne.s32.totalorder %s92, %s94
      %p98 = scmp.eq.s32.totalorder %s23, 0
      %p99 = por %p97, %p98
      %p100 = scmp.ne.s32.totalorder %s92, %s94
      %p101 = scmp.eq.s32.totalorder %s28, 1
      %p102 = por %p100, %p101
      %p103 = scmp.ne.s32.totalorder %s94, %s95
      %p104 = scmp.eq.s32.totalorder %s28, 0
      %p105 = por %p103, %p104
      %p106 = scmp.ne.s32.totalorder %s94, %s95
      %p107 = scmp.eq.s32.totalorder %s29, 1
      %p108 = por %p106, %p107
      %p110 = scmp.ne.s32.totalorder %s95, %s109
      %p111 = scmp.eq.s32.totalorder %s29, 0
      %p112 = por %p110, %p111
      %s114 = sadd.s32 %s113, 1
      %p117 = scmp.eq.s32.totalorder %s23, 1
      %p118 = scmp.ne.s32.totalorder %s113, %s115
      %p119 = scmp.eq.s32.totalorder %s23, 0
      %p120 = por %p118, %p119
      %p121 = scmp.ne.s32.totalorder %s113, %s115
      %p122 = scmp.eq.s32.totalorder %s28, 1
      %p123 = por %p121, %p122
      %p124 = scmp.ne.s32.totalorder %s115, %s116
      %p125 = scmp.eq.s32.totalorder %s28, 0
      %p126 = por %p124, %p125
      %p127 = scmp.ne.s32.totalorder %s115, %s116
      %p128 = scmp.eq.s32.totalorder %s29, 1
      %p129 = por %p127, %p128
      %p131 = scmp.ne.s32.totalorder %s116, %s130
      %p132 = scmp.eq.s32.totalorder %s29, 0
      %p133 = por %p131, %p132
      %s135 = sadd.s32 %s134, 1
      %p138 = scmp.eq.s32.totalorder %s23, 1
      %p139 = scmp.ne.s32.totalorder %s134, %s136
      %p140 = scmp.eq.s32.totalorder %s23, 0
      %p141 = por %p139, %p140
      %p142 = scmp.ne.s32.totalorder %s134, %s136
      %p143 = scmp.eq.s32.totalorder %s28, 1
      %p144 = por %p142, %p143
      %p145 = scmp.ne.s32.totalorder %s136, %s137
      %p146 = scmp.eq.s32.totalorder %s28, 0
      %p147 = por %p145, %p146
      %p148 = scmp.ne.s32.totalorder %s136, %s137
      %p149 = scmp.eq.s32.totalorder %s29, 1
      %p150 = por %p148, %p149
      %p152 = scmp.ne.s32.totalorder %s137, %s151
      %p153 = scmp.eq.s32.totalorder %s29, 0
      %p154 = por %p152, %p153
      %s155 = ssub.s32 %s30, %s42
      %s156 = ssub.s32 %s31, %s38
      %s157 = sor.u32 %s155, %s156
      %p158 = scmp.eq.s32.totalorder %s157, 0
      %s160 = sadd.s32 %s159, 1
      %s161 = scalar_select %p158, %s159, %s160
      %p164 = pneg %p158
      %p165 = scmp.eq.s32.totalorder %s23, 1
      %p166 = por %p164, %p165
      %p167 = scmp.ne.s32.totalorder %s159, %s162
      %p168 = scmp.eq.s32.totalorder %s23, 0
      %p169 = por %p167, %p168
      %p170 = scmp.ne.s32.totalorder %s159, %s162
      %p171 = scmp.eq.s32.totalorder %s28, 1
      %p172 = por %p170, %p171
      %p173 = scmp.ne.s32.totalorder %s162, %s163
      %p174 = scmp.eq.s32.totalorder %s28, 0
      %p175 = por %p173, %p174
      %p176 = scmp.ne.s32.totalorder %s162, %s163
      %p177 = scmp.eq.s32.totalorder %s29, 1
      %p178 = por %p176, %p177
      %p180 = scmp.ne.s32.totalorder %s163, %s179
      %p181 = scmp.eq.s32.totalorder %s29, 0
      %p182 = por %p180, %p181
      %s183 = ssub.s32 %s30, %s42
      %s184 = ssub.s32 %s31, %s38
      %s185 = sor.u32 %s183, %s184
      %p186 = scmp.eq.s32.totalorder %s185, 0
      %s188 = sadd.s32 %s187, 1
      %s189 = scalar_select %p186, %s187, %s188
      %p192 = pneg %p186
      %p193 = scmp.eq.s32.totalorder %s23, 1
      %p194 = por %p192, %p193
      %p195 = scmp.ne.s32.totalorder %s187, %s190
      %p196 = scmp.eq.s32.totalorder %s23, 0
      %p197 = por %p195, %p196
      %p198 = scmp.ne.s32.totalorder %s187, %s190
      %p199 = scmp.eq.s32.totalorder %s28, 1
      %p200 = por %p198, %p199
      %p201 = scmp.ne.s32.totalorder %s190, %s191
      %p202 = scmp.eq.s32.totalorder %s28, 0
      %p203 = por %p201, %p202
      %p204 = scmp.ne.s32.totalorder %s190, %s191
      %p205 = scmp.eq.s32.totalorder %s29, 1
      %p206 = por %p204, %p205
      %p208 = scmp.ne.s32.totalorder %s191, %s207
      %p209 = scmp.eq.s32.totalorder %s29, 0
      %p210 = por %p208, %p209
      %p211 = scmp.le.s32.totalorder 1, %s23
      %p212 = scmp.lt.s32.totalorder %s23, 3
      %p213 = pnand %p211, %p212
      %p214 = pneg %p213
      // Predicated region
      $region9: #{tpu_custom_call.1} parent=5 // pred_check
        _
      $region10: #{tpu_custom_call.1} parent=5 // pred_check_branch
        %216 = sbr.rel (%p213) target = $region12
      $region11: #{tpu_custom_call.1} parent=5 // pred_region
        %s217 = ssub.s32 %s23, 1
        // Predicated region
        $region13: #{tpu_custom_call.1} parent=11 // pred_check
          %p218 = pneg %p84
        $region14: #{tpu_custom_call.1} parent=11 // pred_check_branch
          %220 = sbr.rel (%p218) target = $region16
        $region15: #{tpu_custom_call.1} parent=11 // pred_region
          %222 = vsyncadd [#allocation6], 0
          %s223 = sshll.u32 %s1, 4
          %s224 = int_to_ptr.hbm [resolvable:$true] %s223
          %s225 = sshll.u32 [#allocation5], 4
          %s226 = int_to_ptr.vmem [resolvable:$true] %s225
          %231 = dma.hbm_to_vmem [thread:$0]  %s224, 256, %s226, [#allocation6], 64, 64, 4
        $region16: #{tpu_custom_call.1} parent=11 // pred_fallthru
          _
        // Predicated region
        $region17: #{tpu_custom_call.1} parent=11 // pred_check
          %p232 = pneg %p105
        $region18: #{tpu_custom_call.1} parent=11 // pred_check_branch
          %234 = sbr.rel (%p232) target = $region20
        $region19: #{tpu_custom_call.1} parent=11 // pred_region
          _
        $region20: #{tpu_custom_call.1} parent=11 // pred_fallthru
          _
        // Predicated region
        $region21: #{tpu_custom_call.1} parent=11 // pred_check
          %p235 = pneg %p126
        $region22: #{tpu_custom_call.1} parent=11 // pred_check_branch
          %237 = sbr.rel (%p235) target = $region24
        $region23: #{tpu_custom_call.1} parent=11 // pred_region
          %239 = vsyncadd [#allocation6], 0
          %s240 = sshll.u32 %s3, 4
          %s241 = int_to_ptr.hbm [resolvable:$true] %s240
          %s242 = sshll.u32 [#allocation7], 4
          %s243 = int_to_ptr.vmem [resolvable:$true] %s242
          %248 = dma.hbm_to_vmem [thread:$0]  %s241, 256, %s243, [#allocation6], 64, 64, 4
        $region24: #{tpu_custom_call.1} parent=11 // pred_fallthru
          _
        // Predicated region
        $region25: #{tpu_custom_call.1} parent=11 // pred_check
          %p249 = pneg %p147
        $region26: #{tpu_custom_call.1} parent=11 // pred_check_branch
          %251 = sbr.rel (%p249) target = $region28
        $region27: #{tpu_custom_call.1} parent=11 // pred_region
          _
        $region28: #{tpu_custom_call.1} parent=11 // pred_fallthru
          _
      $region12: #{tpu_custom_call.1} parent=5 // pred_fallthru
        _
      %p252 = scmp.lt.s32.totalorder %s23, 2
      // Predicated region
      $region29: #{tpu_custom_call.1} parent=5 // pred_check
        %p253 = pneg %p252
      $region30: #{tpu_custom_call.1} parent=5 // pred_check_branch
        %255 = sbr.rel (%p253) target = $region32
      $region31: #{tpu_custom_call.1} parent=5 // pred_region
        // Predicated region
        $region33: #{tpu_custom_call.1} parent=31 // pred_check
          %p256 = pneg %p57
        $region34: #{tpu_custom_call.1} parent=31 // pred_check_branch
          %258 = sbr.rel (%p256) target = $region36
        $region35: #{tpu_custom_call.1} parent=31 // pred_region
          %s259 = sand.u32 %s47, 1
          %s260 = scalar_lea.sflag [#allocation3], %s259
          %s261 = sand.u32 %s47, 1
          %s262 = smul.addr %s261, 4
          %s263 = scalar_lea.vmem [#allocation2], %s262
          %265 = vsyncadd %s260, 0
          %s266 = sadd.s32 %s31, %s30
          %s267 = smul.addr %s266, 4
          %s268 = scalar_lea.hbm %s0, %s267
          %s270 = sshll.u32 %s268, 4
          %s271 = int_to_ptr.hbm [resolvable:$true] %s270
          %s272 = sshll.u32 %s263, 4
          %s273 = int_to_ptr.vmem [resolvable:$true] %s272
          %275 = dma.hbm_to_vmem [thread:$0]  %s271, 64, %s273, %s260
        $region36: #{tpu_custom_call.1} parent=31 // pred_fallthru
          _
      $region32: #{tpu_custom_call.1} parent=5 // pred_fallthru
        _
      %p276 = scmp.le.s32.totalorder 1, %s23
      %p277 = scmp.lt.s32.totalorder %s23, 3
      %p278 = pnand %p276, %p277
      %p279 = pneg %p278
      // Predicated region
      $region37: #{tpu_custom_call.1} parent=5 // pred_check
        _
      $region38: #{tpu_custom_call.1} parent=5 // pred_check_branch
        %281 = sbr.rel (%p278) target = $region40
      $region39: #{tpu_custom_call.1} parent=5 // pred_region
        %s282 = ssub.s32 %s23, 1
        %s283 = sand.u32 %s50, 1
        %s284 = scalar_lea.sflag [#allocation3], %s283
        %s285 = sand.u32 %s50, 1
        %s286 = smul.addr %s285, 4
        %s287 = scalar_lea.vmem [#allocation2], %s286
        // Predicated region
        $region41: #{tpu_custom_call.1} parent=39 // pred_check
          %p288 = pneg %p63
        $region42: #{tpu_custom_call.1} parent=39 // pred_check_branch
          %290 = sbr.rel (%p288) target = $region44
        $region43: #{tpu_custom_call.1} parent=39 // pred_region
          %292 = dma.done %s284, 64
        $region44: #{tpu_custom_call.1} parent=39 // pred_fallthru
          _
        // Predicated region
        $region45: #{tpu_custom_call.1} parent=39 // pred_check
          %p293 = pneg %p84
        $region46: #{tpu_custom_call.1} parent=39 // pred_check_branch
          %295 = sbr.rel (%p293) target = $region48
        $region47: #{tpu_custom_call.1} parent=39 // pred_region
          %297 = dma.done [#allocation6], 256
        $region48: #{tpu_custom_call.1} parent=39 // pred_fallthru
          _
        // Predicated region
        $region49: #{tpu_custom_call.1} parent=39 // pred_check
          %p298 = pneg %p126
        $region50: #{tpu_custom_call.1} parent=39 // pred_check_branch
          %300 = sbr.rel (%p298) target = $region52
        $region51: #{tpu_custom_call.1} parent=39 // pred_region
          %302 = dma.done [#allocation6], 256
        $region52: #{tpu_custom_call.1} parent=39 // pred_fallthru
          _
        %s303 = sand.u32 %s50, 1
        %s304 = scalar_lea.sflag [#allocation3], %s303
        %s305 = sand.u32 %s50, 1
        %s306 = smul.addr %s305, 4
        %s307 = scalar_lea.vmem [#allocation2], %s306
        %p308 = pneg %p63
        %p309 = pneg %p60
        %p310 = pneg %p84
        %p311 = pneg %p81
        %p312 = pneg %p105
        %p313 = pneg %p102
        %p314 = pneg %p126
        %p315 = pneg %p123
        %p316 = pneg %p147
        %p317 = pneg %p144
        %p318 = pneg %p175
        %p319 = pneg %p172
        %s320 = sand.u32 %s162, 1
        %s321 = scalar_lea.sflag [#allocation4], %s320
        %s322 = sand.u32 %s162, 1
        %s323 = smul.addr %s322, 4
        %s324 = scalar_lea.vmem [#allocation8], %s323
        %p325 = pneg %p203
        %p326 = pneg %p200
        %s327 = sand.u32 %s190, 1
        %s328 = scalar_lea.sflag [#allocation10], %s327
        %s329 = sand.u32 %s190, 1
        %s330 = smul.addr %s329, 4
        %s331 = scalar_lea.vmem [#allocation9], %s330
        %v333 = vld [vmem:[%s287] sm:$0xf]
        %v334 = vld [vmem:[#allocation5] sm:$0xf]
        %v335 = vld [vmem:[#allocation5 + $0x4] sm:$0xf]
        %v336 = vld [vmem:[#allocation5 + $0x8] sm:$0xf]
        %v337 = vld [vmem:[#allocation5 + $0xc] sm:$0xf]
        %v338 = vld [vmem:[%s2] sm:$0x1]
        %v340 = vperm.slane %v338, 0
        %v346 = vunpack.c.l.b16 %v334
        %v347 = vunpack.c.l.b16 %v335
        %v348 = vunpack.c.l.b16 %v336
        %v349 = vunpack.c.l.b16 %v337
        %v350 = vpack.c.b16 %v347, %v346
        %v351 = vpack.c.b16 %v349, %v348
        %vm354 = vcmask 261120
        %v356 = vsel %vm354, %v333, 0
        %358 = vmatpush.bf16.msra.mxu0 0
        %359 = vmatpush.bf16.msra.mxu0 0
        %360 = vmatpush.bf16.msra.mxu0 0
        %361 = vmatpush.bf16.msra.mxu0 0
        %362 = vmatpush.bf16.msra.mxu0 0
        %363 = vmatpush.bf16.msra.mxu0 0
        %364 = vmatpush.bf16.msra.mxu0 %v351
        %365 = vmatpush.bf16.msra.mxu0 %v350
        %366 = vmatmul.bf16.gmra.mxu0 %v356
        %v367 = vpop.f32.mrf.mxu0
        %v368 = vadd.f32 %v340, %v367
        %v369 = vpop.f32.mrf.mxu0
        %370 = vdwg.mxu0
        %v371 = vld [vmem:[#allocation7] sm:$0xf]
        %v372 = vld [vmem:[#allocation7 + $0x4] sm:$0xf]
        %v373 = vld [vmem:[#allocation7 + $0x8] sm:$0xf]
        %v374 = vld [vmem:[#allocation7 + $0xc] sm:$0xf]
        %v375 = vld [vmem:[%s4] sm:$0x1]
        %v377 = vperm.slane %v375, 0
        %v383 = vunpack.c.l.b16 %v371
        %v384 = vunpack.c.l.b16 %v372
        %v385 = vunpack.c.l.b16 %v373
        %v386 = vunpack.c.l.b16 %v374
        %v387 = vpack.c.b16 %v384, %v383
        %v388 = vpack.c.b16 %v386, %v385
        %391 = vmatpush.bf16.msra.mxu0 0
        %392 = vmatpush.bf16.msra.mxu0 0
        %393 = vmatpush.bf16.msra.mxu0 0
        %394 = vmatpush.bf16.msra.mxu0 0
        %395 = vmatpush.bf16.msra.mxu0 0
        %396 = vmatpush.bf16.msra.mxu0 0
        %397 = vmatpush.bf16.msra.mxu0 %v388
        %398 = vmatpush.bf16.msra.mxu0 %v387
        %399 = vmatmul.bf16.gmra.mxu0 %v356
        %v400 = vpop.f32.mrf.mxu0
        %v401 = vadd.f32 %v377, %v400
        %v402 = vpop.f32.mrf.mxu0
        %403 = vdwg.mxu0
        %v404 = vpack.c.bf16 %v368, %v368
        %vm405 = vcmask 257024
        %406 = vst.msk [vmem:[%s324] sm:$0xf] %vm405, %v404
        %v407 = vpack.c.bf16 %v401, %v401
        %408 = vst.msk [vmem:[%s331] sm:$0xf] %vm405, %v407
        %s409 = sand.u32 %s162, 1
        %s410 = scalar_lea.sflag [#allocation4], %s409
        %s411 = sand.u32 %s162, 1
        %s412 = smul.addr %s411, 4
        %s413 = scalar_lea.vmem [#allocation8], %s412
        %s414 = sand.u32 %s190, 1
        %s415 = scalar_lea.sflag [#allocation10], %s414
        %s416 = sand.u32 %s190, 1
        %s417 = smul.addr %s416, 4
        %s418 = scalar_lea.vmem [#allocation9], %s417
        // Predicated region
        $region53: #{tpu_custom_call.1} parent=39 // pred_check
          %p419 = pneg %p172
        $region54: #{tpu_custom_call.1} parent=39 // pred_check_branch
          %421 = sbr.rel (%p419) target = $region56
        $region55: #{tpu_custom_call.1} parent=39 // pred_region
          %423 = vsyncadd %s410, 0
          %s424 = sadd.s32 %s33, %s32
          %s425 = smul.addr %s424, 4
          %s426 = scalar_lea.hbm %s5, %s425
          %s428 = sshll.u32 %s413, 4
          %s429 = int_to_ptr.vmem [resolvable:$true] %s428
          %s430 = sshll.u32 %s426, 4
          %s431 = int_to_ptr.hbm [resolvable:$true] %s430
          %433 = dma.vmem_to_hbm [thread:$0]  %s429, 64, %s431, %s410
        $region56: #{tpu_custom_call.1} parent=39 // pred_fallthru
          _
        // Predicated region
        $region57: #{tpu_custom_call.1} parent=39 // pred_check
          %p434 = pneg %p200
        $region58: #{tpu_custom_call.1} parent=39 // pred_check_branch
          %436 = sbr.rel (%p434) target = $region60
        $region59: #{tpu_custom_call.1} parent=39 // pred_region
          %438 = vsyncadd %s415, 0
          %s439 = sadd.s32 %s33, %s32
          %s440 = smul.addr %s439, 4
          %s441 = scalar_lea.hbm %s6, %s440
          %s443 = sshll.u32 %s418, 4
          %s444 = int_to_ptr.vmem [resolvable:$true] %s443
          %s445 = sshll.u32 %s441, 4
          %s446 = int_to_ptr.hbm [resolvable:$true] %s445
          %448 = dma.vmem_to_hbm [thread:$0]  %s444, 64, %s446, %s415
        $region60: #{tpu_custom_call.1} parent=39 // pred_fallthru
          _
      $region40: #{tpu_custom_call.1} parent=5 // pred_fallthru
        _
      %p449 = scmp.le.s32.totalorder 2, %s23
      // Predicated region
      $region61: #{tpu_custom_call.1} parent=5 // pred_check
        %p450 = pneg %p449
      $region62: #{tpu_custom_call.1} parent=5 // pred_check_branch
        %452 = sbr.rel (%p450) target = $region64
      $region63: #{tpu_custom_call.1} parent=5 // pred_region
        %s453 = ssub.s32 %s23, 2
        // Predicated region
        $region65: #{tpu_custom_call.1} parent=63 // pred_check
          %p454 = pneg %p178
        $region66: #{tpu_custom_call.1} parent=63 // pred_check_branch
          %456 = sbr.rel (%p454) target = $region68
        $region67: #{tpu_custom_call.1} parent=63 // pred_region
          %s457 = sand.u32 %s163, 1
          %s458 = scalar_lea.sflag [#allocation4], %s457
          %s459 = sand.u32 %s163, 1
          %s460 = smul.addr %s459, 4
          %s461 = scalar_lea.vmem [#allocation8], %s460
          %463 = dma.done %s458, 64
        $region68: #{tpu_custom_call.1} parent=63 // pred_fallthru
          _
        // Predicated region
        $region69: #{tpu_custom_call.1} parent=63 // pred_check
          %p464 = pneg %p206
        $region70: #{tpu_custom_call.1} parent=63 // pred_check_branch
          %466 = sbr.rel (%p464) target = $region72
        $region71: #{tpu_custom_call.1} parent=63 // pred_region
          %s467 = sand.u32 %s191, 1
          %s468 = scalar_lea.sflag [#allocation10], %s467
          %s469 = sand.u32 %s191, 1
          %s470 = smul.addr %s469, 4
          %s471 = scalar_lea.vmem [#allocation9], %s470
          %473 = dma.done %s468, 64
        $region72: #{tpu_custom_call.1} parent=63 // pred_fallthru
          _
      $region64: #{tpu_custom_call.1} parent=5 // pred_fallthru
        _
    $region6: #{tpu_custom_call.1} parent=1 // loop_footer
      %s27 = sadd.s32 1, %s23
    $region7: #{tpu_custom_call.1} parent=1 // loop_footer_branch
      %22 = sbr.rel target = $region3
    $region8: #{tpu_custom_call.1} parent=1 // loop_exit
      _
    %474 = vsyncpa [#allocation3], 1
    %s475 = scalar_lea.sflag [#allocation3], 1
    %476 = vsyncpa %s475, 1
    %477 = vsyncpa [#allocation6], 1
    %478 = vsyncpa [#allocation4], 1
    %s479 = scalar_lea.sflag [#allocation4], 1
    %480 = vsyncpa %s479, 1
    %481 = vsyncpa [#allocation10], 1
    %s482 = scalar_lea.sflag [#allocation10], 1
    %483 = vsyncpa %s482, 1

</llo_original>
